<compile_context>
chip_gen: v7x
topology: tpu7x:2x2x1
jax: 0.10.0
libtpu: 0.0.40
codegen_flags: <defaults>
</compile_context>

<pallas_src>
import jax
import jax.numpy as jnp
from jax.experimental import pallas as pl
from jax.experimental.pallas import tpu as pltpu


# ------------------------------- kernels -----------------------------------

def _ffn_resident_kernel(x_ref, w1_ref, b1_ref, w2_ref, b2_ref, o_ref):
    # x: (TM, E); w1: (E, H); b1: (1, H) f32; w2: (H, E); b2: (1, E) f32
    x = x_ref[...]
    h = jnp.dot(x, w1_ref[...], preferred_element_type=jnp.float32) + b1_ref[...]
    h = jnp.maximum(h, 0.0)                          # ReLU (VPU, hidden under MXU)
    # dropout (inference mode) == identity
    out = jnp.dot(h.astype(w2_ref.dtype), w2_ref[...],
                  preferred_element_type=jnp.float32) + b2_ref[...]
    o_ref[...] = out.astype(o_ref.dtype)


def _ffn_htiled_kernel(x_ref, w1_ref, b1_ref, w2_ref, b2_ref, o_ref, acc_ref):
    # grid = (M tiles, H tiles); accumulate fc2 partial products over H chunks.
    h_idx = pl.program_id(1)

    @pl.when(h_idx == 0)
    def _():
        acc_ref[...] = jnp.zeros_like(acc_ref)

    x = x_ref[...]
    h = jnp.dot(x, w1_ref[...], preferred_element_type=jnp.float32) + b1_ref[...]
    h = jnp.maximum(h, 0.0)
    acc_ref[...] += jnp.dot(h.astype(w2_ref.dtype), w2_ref[...],
                            preferred_element_type=jnp.float32)

    @pl.when(h_idx == pl.num_programs(1) - 1)
    def _():
        o_ref[...] = (acc_ref[...] + b2_ref[...]).astype(o_ref.dtype)


# ------------------------------- helpers ------------------------------------

def _vmem_cap_bytes():
    """~85% of this generation's per-core VMEM (conservative fallback: v7x 64MiB)."""
    try:
        cap = int(pltpu.get_tpu_info().vmem_capacity_bytes)
    except Exception:
        cap = 64 << 20
    return max(int(cap * 0.85), 16 << 20)


def _const_spec(shape, index_map):
    """Constant-index BlockSpec; single-buffered (block index never changes)."""
    try:
        return pl.BlockSpec(shape, index_map, pipeline_mode=pl.Buffered(1))
    except TypeError:  # older jax without pipeline_mode kwarg
        return pl.BlockSpec(shape, index_map)


def _pick_tm(M, tm_req, sub):
    """Largest tile <= tm_req that is a multiple of `sub`; prefer divisors of M
    so the padding copy is avoided. Returns (tm, needs_pad)."""
    tm_req = max(sub, (min(int(tm_req), max(M, sub)) // sub) * sub)
    cand = tm_req
    while cand >= sub:
        if M % cand == 0:
            return cand, False
        cand -= sub
    return tm_req, True


# ------------------------------- wrapper ------------------------------------

def feed_forward(x, w1, b1, w2, b2, *, tm=512, th=None,
                 prefer_bf16=False, force_h_tiled=False):
    """ViT FeedForward forward pass (dropout in eval mode == identity).

    x:  (B, S, E)  activations (float32 or bfloat16)
    w1: (E, H), b1: (H,)   fc1 (weight stored (in, out))
    w2: (H, E), b2: (E,)   fc2
    E, H must be multiples of 128 (multiples of 256 recommended on v6e/v7x for
    full MXU width). Returns (B, S, E) in x.dtype.
    """
    B, S, E = x.shape
    H = w1.shape[1]
    assert w1.shape == (E, H) and w2.shape == (H, E)
    assert b1.shape == (H,) and b2.shape == (E,)
    assert E % 128 == 0 and H % 128 == 0, "E and H must be multiples of 128"

    out_dtype = x.dtype
    if prefer_bf16:
        x = x.astype(jnp.bfloat16)        # MXU-native storage on v5e/v6e/v7x
    act_dtype = x.dtype
    w1 = w1.astype(act_dtype)
    w2 = w2.astype(act_dtype)
    itemsize = jnp.dtype(act_dtype).itemsize

    M = B * S
    sub = 16 if itemsize == 2 else 8      # second-minor granularity
    tm, needs_pad = _pick_tm(M, tm, sub)
    n_tiles = pl.cdiv(M, tm)
    Mp = n_tiles * tm

    x2d = x.reshape(M, E)
    if needs_pad and Mp != M:
        # only taken when no divisor-of-M tile exists; padded rows sliced off below
        x2d = jnp.pad(x2d, ((0, Mp - M), (0, 0)))

    b1_2d = b1.reshape(1, H).astype(jnp.float32)   # bias/ReLU path stays f32
    b2_2d = b2.reshape(1, E).astype(jnp.float32)

    cap = _vmem_cap_bytes()

    def _resident_budget(tm_):
        return (4 * tm_ * E * itemsize              # x + out tiles, double-buffered
                + 2 * E * H * itemsize              # w1 + w2, single-buffered
                + (H + E) * 4                       # biases (f32)
                + tm_ * H * 4 + tm_ * E * 4)        # f32 intermediates

    def _htiled_budget(tm_, th_):
        return (4 * tm_ * E * itemsize              # x + out tiles, double-buffered
                + 4 * E * th_ * itemsize            # w1/w2 chunks, double-buffered
                + 2 * th_ * 4 + E * 4               # biases
                + tm_ * E * 4                       # f32 accumulator scratch
                + tm_ * th_ * 4)                    # f32 hidden chunk

    use_h_tiled = force_h_tiled or _resident_budget(tm) > cap

    if not use_h_tiled:
        budget = _resident_budget(tm)
        grid_spec = pltpu.PrefetchScalarGridSpec(
            num_scalar_prefetch=0,
            grid=(n_tiles,),
            in_specs=[
                pl.BlockSpec((tm, E), lambda i: (i, 0)),       # x: streamed over M
                _const_spec((E, H), lambda i: (0, 0)),         # w1: resident, 1 buf
                _const_spec((1, H), lambda i: (0, 0)),         # b1: resident, 1 buf
                _const_spec((H, E), lambda i: (0, 0)),         # w2: resident, 1 buf
                _const_spec((1, E), lambda i: (0, 0)),         # b2: resident, 1 buf
            ],
            out_specs=pl.BlockSpec((tm, E), lambda i: (i, 0)),
        )
        kernel = _ffn_resident_kernel
        dims = ("parallel",)
    else:
        if th is None:
            cands = [t for t in range(H, 127, -128) if H % t == 0]
            th = cands[-1]                          # 128 as last resort
            for t in cands:
                if _htiled_budget(tm, t) <= cap:
                    th = t
                    break
        assert H % th == 0 and th % 128 == 0
        budget = _htiled_budget(tm, th)
        grid_spec = pltpu.PrefetchScalarGridSpec(
            num_scalar_prefetch=0,
            grid=(n_tiles, H // th),
            in_specs=[
                pl.BlockSpec((tm, E), lambda i, h: (i, 0)),    # x: constant over h
                pl.BlockSpec((E, th), lambda i, h: (0, h)),    # w1 chunk, streamed
                pl.BlockSpec((1, th), lambda i, h: (0, h)),    # b1 chunk, streamed
                pl.BlockSpec((th, E), lambda i, h: (h, 0)),    # w2 chunk, streamed
                _const_spec((1, E), lambda i, h: (0, 0)),      # b2: resident, 1 buf
            ],
            out_specs=pl.BlockSpec((tm, E), lambda i, h: (i, 0)),
            scratch_shapes=[pltpu.VMEM((tm, E), jnp.float32)],
        )
        kernel = _ffn_htiled_kernel
        dims = ("parallel", "arbitrary")

    vmem_limit = min(max(int(budget * 1.25) + (2 << 20), 32 << 20), cap)

    out2d = pl.pallas_call(
        kernel,
        out_shape=jax.ShapeDtypeStruct((Mp, E), act_dtype),
        grid_spec=grid_spec,
        compiler_params=pltpu.CompilerParams(
            dimension_semantics=dims,
            vmem_limit_bytes=vmem_limit,
        ),
    )(x2d, w1, b1_2d, w2, b2_2d)

    if Mp != M:
        out2d = out2d[:M]
    out = out2d.reshape(B, S, E)
    return out if out.dtype == out_dtype else out.astype(out_dtype)


def init_params(key, emb_size, hidden_size):
    """Deterministic parameter init mirroring nn.Linear shapes.
       PyTorch stores weight as (out, in); we store transposed (in, out)."""
    k1, k2, k3, k4 = jax.random.split(key, 4)
    bound1 = 1.0 / jnp.sqrt(emb_size)
    bound2 = 1.0 / jnp.sqrt(hidden_size)
    w1 = jax.random.uniform(k1, (emb_size, hidden_size), jnp.float32, -bound1, bound1)
    b1 = jax.random.uniform(k2, (hidden_size,), jnp.float32, -bound1, bound1)
    w2 = jax.random.uniform(k3, (hidden_size, emb_size), jnp.float32, -bound2, bound2)
    b2 = jax.random.uniform(k4, (emb_size,), jnp.float32, -bound2, bound2)
    return w1, b1, w2, b2


if __name__ == "__main__":
    B, S = 2, 16
    emb_size, hidden_size = 128, 256      # small demo dims, lane-dense (128x)

    key = jax.random.PRNGKey(0)
    kx, kp = jax.random.split(key)
    x_f32 = jax.random.normal(kx, (B, S, emb_size), jnp.float32)
    w1_f32, b1, w2_f32, b2 = init_params(kp, emb_size, hidden_size)

    ref_f32 = jnp.maximum(x_f32 @ w1_f32 + b1, 0.0) @ w2_f32 + b2

    # 1) f32, weight-resident path (tm=16 -> grid of 2 M tiles, pipelined)
    out = jax.block_until_ready(feed_forward(x_f32, w1_f32, b1, w2_f32, b2, tm=16))
    assert out.shape == (B, S, emb_size)
    assert jnp.allclose(out, ref_f32, atol=1e-3, rtol=1e-3)

    # 2) f32, forced H-tiled fallback path (2 M tiles x 2 H chunks, accumulator)
    out_ht = jax.block_until_ready(
        feed_forward(x_f32, w1_f32, b1, w2_f32, b2, tm=16, th=128, force_h_tiled=True))
    assert jnp.allclose(out_ht, ref_f32, atol=1e-3, rtol=1e-3)

    # 3) bf16 storage path (MXU-native on v5e/v6e/v7x), f32 accumulation
    out_bf16 = jax.block_until_ready(
        feed_forward(x_f32.astype(jnp.bfloat16), w1_f32.astype(jnp.bfloat16),
                     b1, w2_f32.astype(jnp.bfloat16), b2, tm=16))
    assert out_bf16.dtype == jnp.bfloat16
    assert jnp.allclose(out_bf16.astype(jnp.float32), ref_f32, atol=7.5e-2, rtol=7.5e-2)

    # 4) prefer_bf16: f32 caller, bf16 compute/storage, f32 result dtype
    out_pb = jax.block_until_ready(
        feed_forward(x_f32, w1_f32, b1, w2_f32, b2, prefer_bf16=True))
    assert out_pb.dtype == jnp.float32
    assert jnp.allclose(out_pb, ref_f32, atol=7.5e-2, rtol=7.5e-2)

    print("KERNEL_OK")
</pallas_src>

<mosaic_0001>
module attributes {stable_mosaic.version = 11 : i64} {
  func.func @_ffn_resident_kernel(%arg0: i32, %arg1: memref<16x128xf32, #tpu.memory_space<vmem>>, %arg2: memref<128x256xf32, #tpu.memory_space<vmem>>, %arg3: memref<1x256xf32, #tpu.memory_space<vmem>>, %arg4: memref<256x128xf32, #tpu.memory_space<vmem>>, %arg5: memref<1x128xf32, #tpu.memory_space<vmem>>, %arg6: memref<16x128xf32, #tpu.memory_space<vmem>>) attributes {dimension_semantics = [#tpu.dimension_semantics<parallel>], iteration_bounds = array<i64: 2>, scalar_prefetch = 0 : i64, scratch_operands = 0 : i64, tpu.core_type = #tpu.core_type<tc>, window_params = [{transform_indices = @transform_0, window_bounds = array<i64: 16, 128>}, {pipeline_mode = #tpu.pipeline_mode<synchronous>, transform_indices = @transform_1, window_bounds = array<i64: 128, 256>}, {pipeline_mode = #tpu.pipeline_mode<synchronous>, transform_indices = @transform_2, window_bounds = array<i64: 1, 256>}, {pipeline_mode = #tpu.pipeline_mode<synchronous>, transform_indices = @transform_3, window_bounds = array<i64: 256, 128>}, {pipeline_mode = #tpu.pipeline_mode<synchronous>, transform_indices = @transform_4, window_bounds = array<i64: 1, 128>}, {transform_indices = @transform_5, window_bounds = array<i64: 16, 128>}]} {
    %c0 = arith.constant 0 : index
    %c0_0 = arith.constant 0 : index
    %0 = vector.load %arg1[%c0, %c0_0] : memref<16x128xf32, #tpu.memory_space<vmem>>, vector<16x128xf32>
    %c0_1 = arith.constant 0 : index
    %c0_2 = arith.constant 0 : index
    %1 = vector.load %arg2[%c0_1, %c0_2] : memref<128x256xf32, #tpu.memory_space<vmem>>, vector<128x256xf32>
    %cst = arith.constant dense<0.000000e+00> : vector<16x256xf32>
    %2 = tpu.matmul %0, %1, %cst {dimension_numbers = #tpu.dot_dimension_numbers<[1], [0], [0], [1], [0, 0, 1, 1], [], []>} : vector<16x128xf32>, vector<128x256xf32>, vector<16x256xf32> -> vector<16x256xf32>
    %c0_3 = arith.constant 0 : index
    %c0_4 = arith.constant 0 : index
    %3 = vector.load %arg3[%c0_3, %c0_4] : memref<1x256xf32, #tpu.memory_space<vmem>>, vector<1x256xf32>
    %4 = vector.broadcast %3 : vector<1x256xf32> to vector<16x256xf32>
    %5 = arith.addf %2, %4 : vector<16x256xf32>
    %cst_5 = arith.constant 0.000000e+00 : f32
    %6 = vector.broadcast %cst_5 : f32 to vector<16x256xf32>
    %7 = arith.maximumf %5, %6 : vector<16x256xf32>
    %c0_6 = arith.constant 0 : index
    %c0_7 = arith.constant 0 : index
    %8 = vector.load %arg4[%c0_6, %c0_7] : memref<256x128xf32, #tpu.memory_space<vmem>>, vector<256x128xf32>
    %cst_8 = arith.constant dense<0.000000e+00> : vector<16x128xf32>
    %9 = tpu.matmul %7, %8, %cst_8 {dimension_numbers = #tpu.dot_dimension_numbers<[1], [0], [0], [1], [0, 0, 1, 1], [], []>} : vector<16x256xf32>, vector<256x128xf32>, vector<16x128xf32> -> vector<16x128xf32>
    %c0_9 = arith.constant 0 : index
    %c0_10 = arith.constant 0 : index
    %10 = vector.load %arg5[%c0_9, %c0_10] : memref<1x128xf32, #tpu.memory_space<vmem>>, vector<1x128xf32>
    %11 = vector.broadcast %10 : vector<1x128xf32> to vector<16x128xf32>
    %12 = arith.addf %9, %11 : vector<16x128xf32>
    %c0_11 = arith.constant 0 : index
    %c0_12 = arith.constant 0 : index
    %13 = vector.load %arg6[%c0_11, %c0_12] : memref<16x128xf32, #tpu.memory_space<vmem>>, vector<16x128xf32>
    tpu.vector_store %arg6[%c0_11, %c0_12], %12 {strides = array<i32>} : memref<16x128xf32, #tpu.memory_space<vmem>>, vector<16x128xf32>,
    return
  }
  func.func @transform_0(%arg0: i32) -> (i32, i32) {
    %c0_i32 = arith.constant 0 : i32
    %c0_i32_0 = arith.constant 0 : i32
    return %arg0, %c0_i32 : i32, i32
  }
  func.func @transform_1(%arg0: i32) -> (i32, i32) {
    %c0_i32 = arith.constant 0 : i32
    %c0_i32_0 = arith.constant 0 : i32
    %c0_i32_1 = arith.constant 0 : i32
    return %c0_i32, %c0_i32_0 : i32, i32
  }
  func.func @transform_2(%arg0: i32) -> (i32, i32) {
    %c0_i32 = arith.constant 0 : i32
    %c0_i32_0 = arith.constant 0 : i32
    %c0_i32_1 = arith.constant 0 : i32
    return %c0_i32, %c0_i32_0 : i32, i32
  }
  func.func @transform_3(%arg0: i32) -> (i32, i32) {
    %c0_i32 = arith.constant 0 : i32
    %c0_i32_0 = arith.constant 0 : i32
    %c0_i32_1 = arith.constant 0 : i32
    return %c0_i32, %c0_i32_0 : i32, i32
  }
  func.func @transform_4(%arg0: i32) -> (i32, i32) {
    %c0_i32 = arith.constant 0 : i32
    %c0_i32_0 = arith.constant 0 : i32
    %c0_i32_1 = arith.constant 0 : i32
    return %c0_i32, %c0_i32_0 : i32, i32
  }
  func.func @transform_5(%arg0: i32) -> (i32, i32) {
    %c0_i32 = arith.constant 0 : i32
    %c0_i32_0 = arith.constant 0 : i32
    return %arg0, %c0_i32 : i32, i32
  }
}

</mosaic_0001>

<llo_original>
// kernel: tpu_custom_call.1
$region0: #{tpu_custom_call.1}
  #allocation0 [shape = 'u32[]', space=smem, size = 0x4, offset = 0x4, fixed_abs, tag = 'smem constant byte address 0x4 - core index']
  #allocation1 [shape = 'u32[144,128]{1,0:T(1,128)}', space=vmem, size = 0x12000, scoped, tag = 'internal scratch']
  %s0 = inlined_call_operand.hbm [shape: f32[32,128], index: 0, kind: input, shape index: {}]
  %s1 = inlined_call_operand.hbm [shape: f32[128,256], index: 1, kind: input, shape index: {}]
  %s2 = inlined_call_operand.vmem [shape: f32[1,256], index: 2, kind: input, shape index: {}]
  %s3 = inlined_call_operand.hbm [shape: f32[256,128], index: 3, kind: input, shape index: {}]
  %s4 = inlined_call_operand.vmem [shape: f32[1,128], index: 4, kind: input, shape index: {}]
  %s5 = inlined_call_operand.hbm [shape: f32[32,128], index: 5, kind: output, shape index: {}]
  %s6 = sld [smem:[#allocation0]]
  $region65: #{tpu_custom_call.1} parent=0
    _
  %s8 = ssub.s32 1, %s6
  %s9 = scalar_select 0, %s8, %s6
  $region1: #{tpu_custom_call.1} parent=0
    #allocation2 [shape = 'u8[16384]{0}', space=vmem, size = 0x4000, scoped, tag = 'input window, operand 0']
    #allocation3 [shape = 's32[2]{0}', space=sflag, size = 0x8, scoped, tag = 'scoped memory for tpu_custom_call.1']
    #allocation4 [shape = 's32[2]{0}', space=sflag, size = 0x8, scoped, tag = 'scoped memory for tpu_custom_call.1']
    #allocation5 [shape = 'u8[131072]{0}', space=vmem, size = 0x20000, scoped, tag = 'input window, operand 1, single buffered']
    #allocation6 [shape = 's32[1]{0}', space=sflag, size = 0x4, scoped, tag = 'scoped memory for tpu_custom_call.1']
    #allocation7 [shape = 'u8[131072]{0}', space=vmem, size = 0x20000, scoped, tag = 'input window, operand 3, single buffered']
    #allocation8 [shape = 'u8[16384]{0}', space=vmem, size = 0x4000, scoped, tag = 'output window, operand 0']
    %10 = vsyncpa [#allocation3], 0
    %s11 = scalar_lea.sflag [#allocation3], 1
    %12 = vsyncpa %s11, 0
    %13 = vsyncpa [#allocation6], 0
    %14 = vsyncpa [#allocation4], 0
    %s15 = scalar_lea.sflag [#allocation4], 1
    %16 = vsyncpa %s15, 0
    loop: start=0, step=1, limit=4
    $region2: #{tpu_custom_call.1} parent=1 // loop_pre_header
      _
    $region3: #{tpu_custom_call.1} parent=1 // loop_header
      %s18 = sphi 0, %s22
      %p19 = scmp.ge.s32.totalorder %s18, 4
      %s28 = sphi 0, %s30
      %s31 = sphi 0, %s28
      %s32 = sphi 0, %s31
      %s48 = sphi 0, %s32
      %s52 = sphi 0, %s52
      %s54 = sphi 0, %s52
      %s55 = sphi 0, %s54
      %s69 = sphi 0, %s55
      %s73 = sphi 0, %s73
      %s75 = sphi 0, %s73
      %s76 = sphi 0, %s75
      %s90 = sphi 0, %s76
      %s94 = sphi 0, %s94
      %s96 = sphi 0, %s94
      %s97 = sphi 0, %s96
      %s111 = sphi 0, %s97
      %s115 = sphi 0, %s115
      %s117 = sphi 0, %s115
      %s118 = sphi 0, %s117
      %s132 = sphi 0, %s118
      %s138 = sphi 0, %s140
      %s141 = sphi 0, %s138
      %s142 = sphi 0, %s141
      %s158 = sphi 0, %s142
    $region4: #{tpu_custom_call.1} parent=1 // loop_header_branch
      %21 = sbr.rel (%p19) target = $region8
    $region5: #{tpu_custom_call.1} parent=1 // loop_body
      %s23 = ssub.s32 %s18, 1
      %s24 = ssub.s32 %s18, 2
      %s25 = sadd.s32 %s18, 1
      %s26 = ssub.s32 %s18, %s25
      %p27 = scmp.eq.s32.totalorder %s26, 0
      %s29 = sadd.s32 %s28, 1
      %s30 = scalar_select %p27, %s28, %s29
      %p33 = pneg %p27
      %p34 = scmp.eq.s32.totalorder %s18, 1
      %p35 = por %p33, %p34
      %p36 = scmp.ne.s32.totalorder %s28, %s31
      %p37 = scmp.eq.s32.totalorder %s18, 0
      %p38 = por %p36, %p37
      %p39 = scmp.ne.s32.totalorder %s28, %s31
      %p40 = scmp.eq.s32.totalorder %s23, 1
      %p41 = por %p39, %p40
      %p42 = scmp.ne.s32.totalorder %s31, %s32
      %p43 = scmp.eq.s32.totalorder %s23, 0
      %p44 = por %p42, %p43
      %p45 = scmp.ne.s32.totalorder %s31, %s32
      %p46 = scmp.eq.s32.totalorder %s24, 1
      %p47 = por %p45, %p46
      %p49 = scmp.ne.s32.totalorder %s32, %s48
      %p50 = scmp.eq.s32.totalorder %s24, 0
      %p51 = por %p49, %p50
      %s53 = sadd.s32 %s52, 1
      %p56 = scmp.eq.s32.totalorder %s18, 1
      %p57 = scmp.ne.s32.totalorder %s52, %s54
      %p58 = scmp.eq.s32.totalorder %s18, 0
      %p59 = por %p57, %p58
      %p60 = scmp.ne.s32.totalorder %s52, %s54
      %p61 = scmp.eq.s32.totalorder %s23, 1
      %p62 = por %p60, %p61
      %p63 = scmp.ne.s32.totalorder %s54, %s55
      %p64 = scmp.eq.s32.totalorder %s23, 0
      %p65 = por %p63, %p64
      %p66 = scmp.ne.s32.totalorder %s54, %s55
      %p67 = scmp.eq.s32.totalorder %s24, 1
      %p68 = por %p66, %p67
      %p70 = scmp.ne.s32.totalorder %s55, %s69
      %p71 = scmp.eq.s32.totalorder %s24, 0
      %p72 = por %p70, %p71
      %s74 = sadd.s32 %s73, 1
      %p77 = scmp.eq.s32.totalorder %s18, 1
      %p78 = scmp.ne.s32.totalorder %s73, %s75
      %p79 = scmp.eq.s32.totalorder %s18, 0
      %p80 = por %p78, %p79
      %p81 = scmp.ne.s32.totalorder %s73, %s75
      %p82 = scmp.eq.s32.totalorder %s23, 1
      %p83 = por %p81, %p82
      %p84 = scmp.ne.s32.totalorder %s75, %s76
      %p85 = scmp.eq.s32.totalorder %s23, 0
      %p86 = por %p84, %p85
      %p87 = scmp.ne.s32.totalorder %s75, %s76
      %p88 = scmp.eq.s32.totalorder %s24, 1
      %p89 = por %p87, %p88
      %p91 = scmp.ne.s32.totalorder %s76, %s90
      %p92 = scmp.eq.s32.totalorder %s24, 0
      %p93 = por %p91, %p92
      %s95 = sadd.s32 %s94, 1
      %p98 = scmp.eq.s32.totalorder %s18, 1
      %p99 = scmp.ne.s32.totalorder %s94, %s96
      %p100 = scmp.eq.s32.totalorder %s18, 0
      %p101 = por %p99, %p100
      %p102 = scmp.ne.s32.totalorder %s94, %s96
      %p103 = scmp.eq.s32.totalorder %s23, 1
      %p104 = por %p102, %p103
      %p105 = scmp.ne.s32.totalorder %s96, %s97
      %p106 = scmp.eq.s32.totalorder %s23, 0
      %p107 = por %p105, %p106
      %p108 = scmp.ne.s32.totalorder %s96, %s97
      %p109 = scmp.eq.s32.totalorder %s24, 1
      %p110 = por %p108, %p109
      %p112 = scmp.ne.s32.totalorder %s97, %s111
      %p113 = scmp.eq.s32.totalorder %s24, 0
      %p114 = por %p112, %p113
      %s116 = sadd.s32 %s115, 1
      %p119 = scmp.eq.s32.totalorder %s18, 1
      %p120 = scmp.ne.s32.totalorder %s115, %s117
      %p121 = scmp.eq.s32.totalorder %s18, 0
      %p122 = por %p120, %p121
      %p123 = scmp.ne.s32.totalorder %s115, %s117
      %p124 = scmp.eq.s32.totalorder %s23, 1
      %p125 = por %p123, %p124
      %p126 = scmp.ne.s32.totalorder %s117, %s118
      %p127 = scmp.eq.s32.totalorder %s23, 0
      %p128 = por %p126, %p127
      %p129 = scmp.ne.s32.totalorder %s117, %s118
      %p130 = scmp.eq.s32.totalorder %s24, 1
      %p131 = por %p129, %p130
      %p133 = scmp.ne.s32.totalorder %s118, %s132
      %p134 = scmp.eq.s32.totalorder %s24, 0
      %p135 = por %p133, %p134
      %s136 = ssub.s32 %s18, %s25
      %p137 = scmp.eq.s32.totalorder %s136, 0
      %s139 = sadd.s32 %s138, 1
      %s140 = scalar_select %p137, %s138, %s139
      %p143 = pneg %p137
      %p144 = scmp.eq.s32.totalorder %s18, 1
      %p145 = por %p143, %p144
      %p146 = scmp.ne.s32.totalorder %s138, %s141
      %p147 = scmp.eq.s32.totalorder %s18, 0
      %p148 = por %p146, %p147
      %p149 = scmp.ne.s32.totalorder %s138, %s141
      %p150 = scmp.eq.s32.totalorder %s23, 1
      %p151 = por %p149, %p150
      %p152 = scmp.ne.s32.totalorder %s141, %s142
      %p153 = scmp.eq.s32.totalorder %s23, 0
      %p154 = por %p152, %p153
      %p155 = scmp.ne.s32.totalorder %s141, %s142
      %p156 = scmp.eq.s32.totalorder %s24, 1
      %p157 = por %p155, %p156
      %p159 = scmp.ne.s32.totalorder %s142, %s158
      %p160 = scmp.eq.s32.totalorder %s24, 0
      %p161 = por %p159, %p160
      %p162 = scmp.le.s32.totalorder 1, %s18
      %p163 = scmp.lt.s32.totalorder %s18, 3
      %p164 = pnand %p162, %p163
      %p165 = pneg %p164
      // Predicated region
      $region9: #{tpu_custom_call.1} parent=5 // pred_check
        _
      $region10: #{tpu_custom_call.1} parent=5 // pred_check_branch
        %167 = sbr.rel (%p164) target = $region12
      $region11: #{tpu_custom_call.1} parent=5 // pred_region
        %s168 = ssub.s32 %s18, 1
        // Predicated region
        $region13: #{tpu_custom_call.1} parent=11 // pred_check
          %p169 = pneg %p65
        $region14: #{tpu_custom_call.1} parent=11 // pred_check_branch
          %171 = sbr.rel (%p169) target = $region16
        $region15: #{tpu_custom_call.1} parent=11 // pred_region
          %s173 = ssub.s32 4096, 4096
          %174 = vsyncadd [#allocation6], %s173
          %s175 = sshll.u32 [#allocation5], 4
          %s176 = int_to_ptr.vmem [resolvable:$true] %s175
          %181 = dma.hbm_to_vmem [thread:$0]  %s1, 4096, %s176, [#allocation6], 256, 256, 16
        $region16: #{tpu_custom_call.1} parent=11 // pred_fallthru
          _
        // Predicated region
        $region17: #{tpu_custom_call.1} parent=11 // pred_check
          %p182 = pneg %p86
        $region18: #{tpu_custom_call.1} parent=11 // pred_check_branch
          %184 = sbr.rel (%p182) target = $region20
        $region19: #{tpu_custom_call.1} parent=11 // pred_region
          _
        $region20: #{tpu_custom_call.1} parent=11 // pred_fallthru
          _
        // Predicated region
        $region21: #{tpu_custom_call.1} parent=11 // pred_check
          %p185 = pneg %p107
        $region22: #{tpu_custom_call.1} parent=11 // pred_check_branch
          %187 = sbr.rel (%p185) target = $region24
        $region23: #{tpu_custom_call.1} parent=11 // pred_region
          %s189 = ssub.s32 4096, 4096
          %190 = vsyncadd [#allocation6], %s189
          %s191 = sshll.u32 [#allocation7], 4
          %s192 = int_to_ptr.vmem [resolvable:$true] %s191
          %197 = dma.hbm_to_vmem [thread:$0]  %s3, 4096, %s192, [#allocation6], 128, 128, 8
        $region24: #{tpu_custom_call.1} parent=11 // pred_fallthru
          _
        // Predicated region
        $region25: #{tpu_custom_call.1} parent=11 // pred_check
          %p198 = pneg %p128
        $region26: #{tpu_custom_call.1} parent=11 // pred_check_branch
          %200 = sbr.rel (%p198) target = $region28
        $region27: #{tpu_custom_call.1} parent=11 // pred_region
          _
        $region28: #{tpu_custom_call.1} parent=11 // pred_fallthru
          _
      $region12: #{tpu_custom_call.1} parent=5 // pred_fallthru
        _
      %p201 = scmp.lt.s32.totalorder %s18, 2
      // Predicated region
      $region29: #{tpu_custom_call.1} parent=5 // pred_check
        %p202 = pneg %p201
      $region30: #{tpu_custom_call.1} parent=5 // pred_check_branch
        %204 = sbr.rel (%p202) target = $region32
      $region31: #{tpu_custom_call.1} parent=5 // pred_region
        // Predicated region
        $region33: #{tpu_custom_call.1} parent=31 // pred_check
          %p205 = pneg %p38
        $region34: #{tpu_custom_call.1} parent=31 // pred_check_branch
          %207 = sbr.rel (%p205) target = $region36
        $region35: #{tpu_custom_call.1} parent=31 // pred_region
          %s208 = sand.u32 %s28, 1
          %s209 = scalar_lea.sflag [#allocation3], %s208
          %s210 = sand.u32 %s28, 1
          %s211 = smul.addr %s210, 16
          %s212 = scalar_lea.vmem [#allocation2], %s211
          %s213 = smul.u32 2, %s18
          %s215 = ssub.s32 256, 256
          %216 = vsyncadd %s209, %s215
          %s217 = smul.addr %s213, 128
          %s218 = scalar_lea.hbm %s0, %s217
          %s219 = sshll.u32 %s212, 4
          %s220 = int_to_ptr.vmem [resolvable:$true] %s219
          %225 = dma.hbm_to_vmem [thread:$0]  %s218, 256, %s220, %s209, 128, 128, 8
        $region36: #{tpu_custom_call.1} parent=31 // pred_fallthru
          _
      $region32: #{tpu_custom_call.1} parent=5 // pred_fallthru
        _
      %p226 = scmp.le.s32.totalorder 1, %s18
      %p227 = scmp.lt.s32.totalorder %s18, 3
      %p228 = pnand %p226, %p227
      %p229 = pneg %p228
      // Predicated region
      $region37: #{tpu_custom_call.1} parent=5 // pred_check
        _
      $region38: #{tpu_custom_call.1} parent=5 // pred_check_branch
        %231 = sbr.rel (%p228) target = $region40
      $region39: #{tpu_custom_call.1} parent=5 // pred_region
        %s232 = ssub.s32 %s18, 1
        %s233 = sand.u32 %s31, 1
        %s234 = scalar_lea.sflag [#allocation3], %s233
        %s235 = sand.u32 %s31, 1
        %s236 = smul.addr %s235, 16
        %s237 = scalar_lea.vmem [#allocation2], %s236
        // Predicated region
        $region41: #{tpu_custom_call.1} parent=39 // pred_check
          %p238 = pneg %p44
        $region42: #{tpu_custom_call.1} parent=39 // pred_check_branch
          %240 = sbr.rel (%p238) target = $region44
        $region43: #{tpu_custom_call.1} parent=39 // pred_region
          %241 = dma.done %s234, 256
        $region44: #{tpu_custom_call.1} parent=39 // pred_fallthru
          _
        // Predicated region
        $region45: #{tpu_custom_call.1} parent=39 // pred_check
          %p242 = pneg %p65
        $region46: #{tpu_custom_call.1} parent=39 // pred_check_branch
          %244 = sbr.rel (%p242) target = $region48
        $region47: #{tpu_custom_call.1} parent=39 // pred_region
          %245 = dma.done [#allocation6], 4096
        $region48: #{tpu_custom_call.1} parent=39 // pred_fallthru
          _
        // Predicated region
        $region49: #{tpu_custom_call.1} parent=39 // pred_check
          %p246 = pneg %p107
        $region50: #{tpu_custom_call.1} parent=39 // pred_check_branch
          %248 = sbr.rel (%p246) target = $region52
        $region51: #{tpu_custom_call.1} parent=39 // pred_region
          %249 = dma.done [#allocation6], 4096
        $region52: #{tpu_custom_call.1} parent=39 // pred_fallthru
          _
        %s250 = sand.u32 %s31, 1
        %s251 = scalar_lea.sflag [#allocation3], %s250
        %s252 = sand.u32 %s31, 1
        %s253 = smul.addr %s252, 16
        %s254 = scalar_lea.vmem [#allocation2], %s253
        %p255 = pneg %p44
        %p256 = pneg %p41
        %p257 = pneg %p65
        %p258 = pneg %p62
        %p259 = pneg %p86
        %p260 = pneg %p83
        %p261 = pneg %p107
        %p262 = pneg %p104
        %p263 = pneg %p128
        %p264 = pneg %p125
        %p265 = pneg %p154
        %p266 = pneg %p151
        %s267 = sand.u32 %s141, 1
        %s268 = scalar_lea.sflag [#allocation4], %s267
        %s269 = sand.u32 %s141, 1
        %s270 = smul.addr %s269, 16
        %s271 = scalar_lea.vmem [#allocation8], %s270
        %s272 = smul.u32 2, %s23
        %s273 = smul.u32 2, %s23
        %v274 = vld [vmem:[%s237] sm:$0xff]
        %v275 = vld [vmem:[%s237 + $0x8] sm:$0xff]
        %v276 = vld [vmem:[#allocation5] sm:$0xff]
        %v277 = vld [vmem:[#allocation5 + $0x8] sm:$0xff]
        %v278 = vld [vmem:[#allocation5 + $0x10] sm:$0xff]
        %v279 = vld [vmem:[#allocation5 + $0x18] sm:$0xff]
        %v280 = vld [vmem:[#allocation5 + $0x20] sm:$0xff]
        %v281 = vld [vmem:[#allocation5 + $0x28] sm:$0xff]
        %v282 = vld [vmem:[#allocation5 + $0x30] sm:$0xff]
        %v283 = vld [vmem:[#allocation5 + $0x38] sm:$0xff]
        %v284 = vld [vmem:[#allocation5 + $0x40] sm:$0xff]
        %v285 = vld [vmem:[#allocation5 + $0x48] sm:$0xff]
        %v286 = vld [vmem:[#allocation5 + $0x50] sm:$0xff]
        %v287 = vld [vmem:[#allocation5 + $0x58] sm:$0xff]
        %v288 = vld [vmem:[#allocation5 + $0x60] sm:$0xff]
        %v289 = vld [vmem:[#allocation5 + $0x68] sm:$0xff]
        %v290 = vld [vmem:[#allocation5 + $0x70] sm:$0xff]
        %v291 = vld [vmem:[#allocation5 + $0x78] sm:$0xff]
        %v292 = vld [vmem:[#allocation5 + $0x80] sm:$0xff]
        %v293 = vld [vmem:[#allocation5 + $0x88] sm:$0xff]
        %v294 = vld [vmem:[#allocation5 + $0x90] sm:$0xff]
        %v295 = vld [vmem:[#allocation5 + $0x98] sm:$0xff]
        %v296 = vld [vmem:[#allocation5 + $0xa0] sm:$0xff]
        %v297 = vld [vmem:[#allocation5 + $0xa8] sm:$0xff]
        %v298 = vld [vmem:[#allocation5 + $0xb0] sm:$0xff]
        %v299 = vld [vmem:[#allocation5 + $0xb8] sm:$0xff]
        %v300 = vld [vmem:[#allocation5 + $0xc0] sm:$0xff]
        %v301 = vld [vmem:[#allocation5 + $0xc8] sm:$0xff]
        %v302 = vld [vmem:[#allocation5 + $0xd0] sm:$0xff]
        %v303 = vld [vmem:[#allocation5 + $0xd8] sm:$0xff]
        %v304 = vld [vmem:[#allocation5 + $0xe0] sm:$0xff]
        %v305 = vld [vmem:[#allocation5 + $0xe8] sm:$0xff]
        %v306 = vld [vmem:[#allocation5 + $0xf0] sm:$0xff]
        %v307 = vld [vmem:[#allocation5 + $0xf8] sm:$0xff]
        %v308 = vld [vmem:[%s2] sm:$0x3]
        %v310 = vlaneseq
        %v311 = vshrl.u32 %v310, 7
        %v312 = vsub.s32 0, %v311
        %v313 = vrot.slane %v308, %v312
        %v314 = vlaneseq
        %v315 = vshrl.u32 %v314, 7
        %v316 = vsub.s32 1, %v315
        %v317 = vrot.slane %v308, %v316
        %320 = vmatprep.subr.mxu0 %v277
        %321 = vmatpush1.msra.mxu0 %v276
        %322 = vmatprep.subr.mxu0 %v279
        %323 = vmatpush1.msra.mxu0 %v278
        %324 = vmatprep.subr.mxu0 %v281
        %325 = vmatpush1.msra.mxu0 %v280
        %326 = vmatprep.subr.mxu0 %v283
        %327 = vmatpush1.msra.mxu0 %v282
        %328 = vmatprep.subr.mxu0 %v285
        %329 = vmatpush1.msra.mxu0 %v284
        %330 = vmatprep.subr.mxu0 %v287
        %331 = vmatpush1.msra.mxu0 %v286
        %332 = vmatprep.subr.mxu0 %v289
        %333 = vmatpush1.msra.mxu0 %v288
        %334 = vmatprep.subr.mxu0 %v291
        %335 = vmatpush1.msra.mxu0 %v290
        %336 = vmatprep.subr.mxu0 %v293
        %337 = vmatpush1.msra.mxu0 %v292
        %338 = vmatprep.subr.mxu0 %v295
        %339 = vmatpush1.msra.mxu0 %v294
        %340 = vmatprep.subr.mxu0 %v297
        %341 = vmatpush1.msra.mxu0 %v296
        %342 = vmatprep.subr.mxu0 %v299
        %343 = vmatpush1.msra.mxu0 %v298
        %344 = vmatprep.subr.mxu0 %v301
        %345 = vmatpush1.msra.mxu0 %v300
        %346 = vmatprep.subr.mxu0 %v303
        %347 = vmatpush1.msra.mxu0 %v302
        %348 = vmatprep.subr.mxu0 %v305
        %349 = vmatpush1.msra.mxu0 %v304
        %350 = vmatprep.subr.mxu0 %v307
        %351 = vmatpush1.msra.mxu0 %v306
        %352 = vmatprep.subr.mxu0 0.0
        %353 = vmatpush1.msra.mxu0 0.0
        %354 = vmatprep.subr.mxu0 0.0
        %355 = vmatpush1.msra.mxu0 0.0
        %356 = vmatprep.subr.mxu0 0.0
        %357 = vmatpush1.msra.mxu0 0.0
        %358 = vmatprep.subr.mxu0 0.0
        %359 = vmatpush1.msra.mxu0 0.0
        %360 = vmatprep.subr.mxu0 0.0
        %361 = vmatpush1.msra.mxu0 0.0
        %362 = vmatprep.subr.mxu0 0.0
        %363 = vmatpush1.msra.mxu0 0.0
        %364 = vmatprep.subr.mxu0 0.0
        %365 = vmatpush1.msra.mxu0 0.0
        %366 = vmatprep.subr.mxu0 0.0
        %367 = vmatpush1.msra.mxu0 0.0
        %368 = vmatprep.subr.mxu0 0.0
        %369 = vmatpush1.msra.mxu0 0.0
        %370 = vmatprep.subr.mxu0 0.0
        %371 = vmatpush1.msra.mxu0 0.0
        %372 = vmatprep.subr.mxu0 0.0
        %373 = vmatpush1.msra.mxu0 0.0
        %374 = vmatprep.subr.mxu0 0.0
        %375 = vmatpush1.msra.mxu0 0.0
        %376 = vmatprep.subr.mxu0 0.0
        %377 = vmatpush1.msra.mxu0 0.0
        %378 = vmatprep.subr.mxu0 0.0
        %379 = vmatpush1.msra.mxu0 0.0
        %380 = vmatprep.subr.mxu0 0.0
        %381 = vmatpush1.msra.mxu0 0.0
        %382 = vmatprep.subr.mxu0 0.0
        %383 = vmatpush1.msra.mxu0 0.0
        %384 = vmatprep.mubr.f32.mxu0 0.0
        %385 = vmatmul.mubr.f32.gmra.mrb[0].mxu0 %v274
        %v386 = vpop.f32.mrb[0].mxu0
        %v387 = vadd.f32 %v313, %v386
        %v388 = vpop.f32.mrb[0].mxu0
        %v389 = vadd.f32 %v317, %v388
        %390 = vmatprep.mubr.f32.mxu0 0.0
        %391 = vmatmul.mubr.f32.gmra.mrb[0].mxu0 %v275
        %v392 = vpop.f32.mrb[0].mxu0
        %v393 = vadd.f32 %v313, %v392
        %v394 = vpop.f32.mrb[0].mxu0
        %v395 = vadd.f32 %v317, %v394
        %396 = vdwg.mxu0
        %v397 = vmax.f32 %v387, 0.0
        %v398 = vmax.f32 %v389, 0.0
        %v399 = vmax.f32 %v393, 0.0
        %v400 = vmax.f32 %v395, 0.0
        %v401 = vld [vmem:[#allocation7] sm:$0xff]
        %v402 = vld [vmem:[#allocation7 + $0x8] sm:$0xff]
        %v403 = vld [vmem:[#allocation7 + $0x10] sm:$0xff]
        %v404 = vld [vmem:[#allocation7 + $0x18] sm:$0xff]
        %v405 = vld [vmem:[#allocation7 + $0x20] sm:$0xff]
        %v406 = vld [vmem:[#allocation7 + $0x28] sm:$0xff]
        %v407 = vld [vmem:[#allocation7 + $0x30] sm:$0xff]
        %v408 = vld [vmem:[#allocation7 + $0x38] sm:$0xff]
        %v409 = vld [vmem:[#allocation7 + $0x40] sm:$0xff]
        %v410 = vld [vmem:[#allocation7 + $0x48] sm:$0xff]
        %v411 = vld [vmem:[#allocation7 + $0x50] sm:$0xff]
        %v412 = vld [vmem:[#allocation7 + $0x58] sm:$0xff]
        %v413 = vld [vmem:[#allocation7 + $0x60] sm:$0xff]
        %v414 = vld [vmem:[#allocation7 + $0x68] sm:$0xff]
        %v415 = vld [vmem:[#allocation7 + $0x70] sm:$0xff]
        %v416 = vld [vmem:[#allocation7 + $0x78] sm:$0xff]
        %v417 = vld [vmem:[#allocation7 + $0x80] sm:$0xff]
        %v418 = vld [vmem:[#allocation7 + $0x88] sm:$0xff]
        %v419 = vld [vmem:[#allocation7 + $0x90] sm:$0xff]
        %v420 = vld [vmem:[#allocation7 + $0x98] sm:$0xff]
        %v421 = vld [vmem:[#allocation7 + $0xa0] sm:$0xff]
        %v422 = vld [vmem:[#allocation7 + $0xa8] sm:$0xff]
        %v423 = vld [vmem:[#allocation7 + $0xb0] sm:$0xff]
        %v424 = vld [vmem:[#allocation7 + $0xb8] sm:$0xff]
        %v425 = vld [vmem:[#allocation7 + $0xc0] sm:$0xff]
        %v426 = vld [vmem:[#allocation7 + $0xc8] sm:$0xff]
        %v427 = vld [vmem:[#allocation7 + $0xd0] sm:$0xff]
        %v428 = vld [vmem:[#allocation7 + $0xd8] sm:$0xff]
        %v429 = vld [vmem:[#allocation7 + $0xe0] sm:$0xff]
        %v430 = vld [vmem:[#allocation7 + $0xe8] sm:$0xff]
        %v431 = vld [vmem:[#allocation7 + $0xf0] sm:$0xff]
        %v432 = vld [vmem:[#allocation7 + $0xf8] sm:$0xff]
        %v433 = vld [vmem:[%s4] sm:$0x1]
        %v435 = vlaneseq
        %v436 = vshrl.u32 %v435, 7
        %v437 = vsub.s32 0, %v436
        %v438 = vrot.slane %v433, %v437
        %440 = vmatprep.subr.mxu0 0.0
        %441 = vmatpush1.msra.mxu0 %v401
        %442 = vmatprep.subr.mxu0 0.0
        %443 = vmatpush1.msra.mxu0 %v402
        %444 = vmatprep.subr.mxu0 0.0
        %445 = vmatpush1.msra.mxu0 %v403
        %446 = vmatprep.subr.mxu0 0.0
        %447 = vmatpush1.msra.mxu0 %v404
        %448 = vmatprep.subr.mxu0 0.0
        %449 = vmatpush1.msra.mxu0 %v405
        %450 = vmatprep.subr.mxu0 0.0
        %451 = vmatpush1.msra.mxu0 %v406
        %452 = vmatprep.subr.mxu0 0.0
        %453 = vmatpush1.msra.mxu0 %v407
        %454 = vmatprep.subr.mxu0 0.0
        %455 = vmatpush1.msra.mxu0 %v408
        %456 = vmatprep.subr.mxu0 0.0
        %457 = vmatpush1.msra.mxu0 %v409
        %458 = vmatprep.subr.mxu0 0.0
        %459 = vmatpush1.msra.mxu0 %v410
        %460 = vmatprep.subr.mxu0 0.0
        %461 = vmatpush1.msra.mxu0 %v411
        %462 = vmatprep.subr.mxu0 0.0
        %463 = vmatpush1.msra.mxu0 %v412
        %464 = vmatprep.subr.mxu0 0.0
        %465 = vmatpush1.msra.mxu0 %v413
        %466 = vmatprep.subr.mxu0 0.0
        %467 = vmatpush1.msra.mxu0 %v414
        %468 = vmatprep.subr.mxu0 0.0
        %469 = vmatpush1.msra.mxu0 %v415
        %470 = vmatprep.subr.mxu0 0.0
        %471 = vmatpush1.msra.mxu0 %v416
        %472 = vmatprep.subr.mxu0 0.0
        %473 = vmatpush1.msra.mxu0 %v417
        %474 = vmatprep.subr.mxu0 0.0
        %475 = vmatpush1.msra.mxu0 %v418
        %476 = vmatprep.subr.mxu0 0.0
        %477 = vmatpush1.msra.mxu0 %v419
        %478 = vmatprep.subr.mxu0 0.0
        %479 = vmatpush1.msra.mxu0 %v420
        %480 = vmatprep.subr.mxu0 0.0
        %481 = vmatpush1.msra.mxu0 %v421
        %482 = vmatprep.subr.mxu0 0.0
        %483 = vmatpush1.msra.mxu0 %v422
        %484 = vmatprep.subr.mxu0 0.0
        %485 = vmatpush1.msra.mxu0 %v423
        %486 = vmatprep.subr.mxu0 0.0
        %487 = vmatpush1.msra.mxu0 %v424
        %488 = vmatprep.subr.mxu0 0.0
        %489 = vmatpush1.msra.mxu0 %v425
        %490 = vmatprep.subr.mxu0 0.0
        %491 = vmatpush1.msra.mxu0 %v426
        %492 = vmatprep.subr.mxu0 0.0
        %493 = vmatpush1.msra.mxu0 %v427
        %494 = vmatprep.subr.mxu0 0.0
        %495 = vmatpush1.msra.mxu0 %v428
        %496 = vmatprep.subr.mxu0 0.0
        %497 = vmatpush1.msra.mxu0 %v429
        %498 = vmatprep.subr.mxu0 0.0
        %499 = vmatpush1.msra.mxu0 %v430
        %500 = vmatprep.subr.mxu0 0.0
        %501 = vmatpush1.msra.mxu0 %v431
        %502 = vmatprep.subr.mxu0 0.0
        %503 = vmatpush1.msra.mxu0 %v432
        %504 = vmatprep.mubr.f32.mxu0 %v398
        %505 = vmatmul.mubr.f32.gmra.mrb[0].mxu0 %v397
        %v506 = vpop.f32.mrb[0].mxu0
        %v507 = vadd.f32 %v438, %v506
        %v508 = vpop.f32.mrb[0].mxu0
        %509 = vmatprep.mubr.f32.mxu0 %v400
        %510 = vmatmul.mubr.f32.gmra.mrb[0].mxu0 %v399
        %v511 = vpop.f32.mrb[0].mxu0
        %v512 = vadd.f32 %v438, %v511
        %v513 = vpop.f32.mrb[0].mxu0
        %514 = vdwg.mxu0
        %515 = vst [vmem:[%s271] sm:$0xff] %v507
        %516 = vst [vmem:[%s271 + $0x8] sm:$0xff] %v512
        %s517 = sand.u32 %s141, 1
        %s518 = scalar_lea.sflag [#allocation4], %s517
        %s519 = sand.u32 %s141, 1
        %s520 = smul.addr %s519, 16
        %s521 = scalar_lea.vmem [#allocation8], %s520
        // Predicated region
        $region53: #{tpu_custom_call.1} parent=39 // pred_check
          %p522 = pneg %p151
        $region54: #{tpu_custom_call.1} parent=39 // pred_check_branch
          %524 = sbr.rel (%p522) target = $region56
        $region55: #{tpu_custom_call.1} parent=39 // pred_region
          %s525 = smul.u32 2, %s23
          %s527 = ssub.s32 256, 256
          %528 = vsyncadd %s518, %s527
          %s529 = smul.addr %s525, 128
          %s530 = scalar_lea.hbm %s5, %s529
          %s531 = sshll.u32 %s521, 4
          %s532 = int_to_ptr.vmem [resolvable:$true] %s531
          %537 = dma.vmem_to_hbm [thread:$0]  %s532, 256, %s530, %s518, 128, 128, 8
        $region56: #{tpu_custom_call.1} parent=39 // pred_fallthru
          _
      $region40: #{tpu_custom_call.1} parent=5 // pred_fallthru
        _
      %p538 = scmp.le.s32.totalorder 2, %s18
      // Predicated region
      $region57: #{tpu_custom_call.1} parent=5 // pred_check
        %p539 = pneg %p538
      $region58: #{tpu_custom_call.1} parent=5 // pred_check_branch
        %541 = sbr.rel (%p539) target = $region60
      $region59: #{tpu_custom_call.1} parent=5 // pred_region
        %s542 = ssub.s32 %s18, 2
        // Predicated region
        $region61: #{tpu_custom_call.1} parent=59 // pred_check
          %p543 = pneg %p157
        $region62: #{tpu_custom_call.1} parent=59 // pred_check_branch
          %545 = sbr.rel (%p543) target = $region64
        $region63: #{tpu_custom_call.1} parent=59 // pred_region
          %s546 = sand.u32 %s142, 1
          %s547 = scalar_lea.sflag [#allocation4], %s546
          %s548 = sand.u32 %s142, 1
          %s549 = smul.addr %s548, 16
          %s550 = scalar_lea.vmem [#allocation8], %s549
          %551 = dma.done %s547, 256
        $region64: #{tpu_custom_call.1} parent=59 // pred_fallthru
          _
      $region60: #{tpu_custom_call.1} parent=5 // pred_fallthru
        _
    $region6: #{tpu_custom_call.1} parent=1 // loop_footer
      %s22 = sadd.s32 1, %s18
    $region7: #{tpu_custom_call.1} parent=1 // loop_footer_branch
      %17 = sbr.rel target = $region3
    $region8: #{tpu_custom_call.1} parent=1 // loop_exit
      _
    %552 = vsyncpa [#allocation3], 1
    %s553 = scalar_lea.sflag [#allocation3], 1
    %554 = vsyncpa %s553, 1
    %555 = vsyncpa [#allocation6], 1
    %556 = vsyncpa [#allocation4], 1
    %s557 = scalar_lea.sflag [#allocation4], 1
    %558 = vsyncpa %s557, 1

</llo_original>
